<compile_context>
chip_gen: v6e
topology: v6e:2x2x1
jax: 0.10.0
libtpu: 0.0.40
codegen_flags: <defaults>
</compile_context>

<pallas_src>
import jax
import jax.numpy as jnp
from jax import lax
from jax.experimental import pallas as pl
from jax.experimental.pallas import tpu as pltpu


def _se3_exp_kernel(r_ref, t_ref, init_ref, out_ref):
    """SE3 exp([R.weight[0], t.weight[0]] + init) -> flat row-major 4x4 matrix.

    r_ref    : SMEM f32[3]   R.weight[0]
    t_ref    : SMEM f32[3]   t.weight[0]
    init_ref : SMEM f32[6]   init (external calibration se3 + 0.2)
    out_ref  : SMEM f32[16]  row-major [[R, t], [0,0,0,1]]
    """
    # ext = cat(R.weight[0], t.weight[0]) + init      (pure scalar reads / adds)
    wx = r_ref[0] + init_ref[0]
    wy = r_ref[1] + init_ref[1]
    wz = r_ref[2] + init_ref[2]
    vx = t_ref[0] + init_ref[3]
    vy = t_ref[1] + init_ref[4]
    vz = t_ref[2] + init_ref[5]

    theta_sq = wx * wx + wy * wy + wz * wz
    # Raised small-angle threshold (theta < 1e-2): Taylor terms below are accurate to
    # ~1e-9 relative here, and the exact forms are cancellation-safe above it.
    small = theta_sq < 1e-4
    theta_sq_safe = jnp.where(small, 1.0, theta_sq)

    # Independent EUP pushes (sqrt & rsqrt pipeline in the EUP FIFO); sin() does not
    # wait on an rsqrt->mul chain, and sqrt(theta_sq) is the more accurate argument.
    theta = jnp.sqrt(theta_sq_safe)
    inv_t = lax.rsqrt(theta_sq_safe)
    inv_t2 = inv_t * inv_t

    sin_t = jnp.sin(theta)
    sin_h = jnp.sin(0.5 * theta)

    # Rodrigues / left-Jacobian coefficients.
    #   A = sin(t)/t
    #   B = (1-cos(t))/t^2 = 2*sin^2(t/2)/t^2      (cancellation-free form)
    #   C = (t-sin(t))/t^3
    A = jnp.where(small, 1.0 - theta_sq * (1.0 / 6.0), sin_t * inv_t)
    B = jnp.where(small, 0.5 - theta_sq * (1.0 / 24.0),
                  2.0 * sin_h * sin_h * inv_t2)
    C = jnp.where(small, (1.0 / 6.0) - theta_sq * (1.0 / 120.0),
                  (theta - sin_t) * inv_t2 * inv_t)

    # R = I + A*K + B*K^2   with   K = skew(w),  K^2 = w w^T - theta^2 I
    Bxy = B * wx * wy
    Bxz = B * wx * wz
    Byz = B * wy * wz

    # t = V v = v + B*(w x v) + C*(w (w.v) - theta^2 v)
    wdotv = wx * vx + wy * vy + wz * vz
    cx = wy * vz - wz * vy
    cy = wz * vx - wx * vz
    cz = wx * vy - wy * vx

    zero = jnp.float32(0.0)
    one = jnp.float32(1.0)

    # 16 scalar stores into the flat SMEM output (row-major 4x4).
    out_ref[0] = one - B * (wy * wy + wz * wz)
    out_ref[1] = -A * wz + Bxy
    out_ref[2] = A * wy + Bxz
    out_ref[3] = vx + B * cx + C * (wx * wdotv - theta_sq * vx)

    out_ref[4] = A * wz + Bxy
    out_ref[5] = one - B * (wx * wx + wz * wz)
    out_ref[6] = -A * wx + Byz
    out_ref[7] = vy + B * cy + C * (wy * wdotv - theta_sq * vy)

    out_ref[8] = -A * wy + Bxz
    out_ref[9] = A * wx + Byz
    out_ref[10] = one - B * (wx * wx + wy * wy)
    out_ref[11] = vz + B * cz + C * (wz * wdotv - theta_sq * vz)

    out_ref[12] = zero
    out_ref[13] = zero
    out_ref[14] = zero
    out_ref[15] = one


def pose_forward(R_weight, t_weight, init):
    """Pallas wrapper: returns the SE3 element as a 4x4 homogeneous matrix."""
    r = R_weight.reshape(-1).astype(jnp.float32)   # f32[3]
    t = t_weight.reshape(-1).astype(jnp.float32)   # f32[3]
    i = init.reshape(-1).astype(jnp.float32)       # f32[6]
    flat = pl.pallas_call(
        _se3_exp_kernel,
        out_shape=jax.ShapeDtypeStruct((16,), jnp.float32),
        in_specs=[pl.BlockSpec(memory_space=pltpu.MemorySpace.SMEM)] * 3,
        out_specs=pl.BlockSpec(memory_space=pltpu.MemorySpace.SMEM),
        cost_estimate=pl.CostEstimate(flops=80, transcendentals=4,
                                      bytes_accessed=112),
    )(r, t, i)
    return flat.reshape(4, 4)


def _se3_exp_ref(se3):
    """Pure-JAX reference (exp map of the same se3 element), cancellation-safe."""
    se3 = se3.astype(jnp.float32)
    w, v = se3[:3], se3[3:]
    th_sq = jnp.dot(w, w)
    small = th_sq < 1e-4
    th_sq_safe = jnp.where(small, 1.0, th_sq)
    th = jnp.sqrt(th_sq_safe)
    sin_t = jnp.sin(th)
    sin_h = jnp.sin(0.5 * th)
    A = jnp.where(small, 1.0 - th_sq / 6.0, sin_t / th)
    B = jnp.where(small, 0.5 - th_sq / 24.0, 2.0 * sin_h * sin_h / th_sq_safe)
    C = jnp.where(small, 1.0 / 6.0 - th_sq / 120.0,
                  (th - sin_t) / (th_sq_safe * th))
    K = jnp.array([[0.0, -w[2], w[1]],
                   [w[2], 0.0, -w[0]],
                   [-w[1], w[0], 0.0]], dtype=jnp.float32)
    K2 = K @ K
    I3 = jnp.eye(3, dtype=jnp.float32)
    R = I3 + A * K + B * K2
    V = I3 + B * K + C * K2
    t = V @ v
    top = jnp.concatenate([R, t[:, None]], axis=1)
    bot = jnp.array([[0.0, 0.0, 0.0, 1.0]], dtype=jnp.float32)
    return jnp.concatenate([top, bot], axis=0)


if __name__ == "__main__":
    key = jax.random.PRNGKey(0)

    # nn.Embedding(1, 3) weights, zero-initialized as in Pose.__init__.
    R_weight = jnp.zeros((1, 3), dtype=jnp.float32)
    t_weight = jnp.zeros((1, 3), dtype=jnp.float32)

    # self.init = self.correct.se3() + 0.2 ; the external calibration `ext` is synthetic here.
    correct_se3 = jax.random.uniform(key, (6,), dtype=jnp.float32)
    init = correct_se3 + 0.2

    out = pose_forward(R_weight, t_weight, init)
    out = jax.block_until_ready(out)
    ref = _se3_exp_ref(jnp.concatenate([R_weight[0], t_weight[0]]) + init)
    assert jnp.allclose(out, ref, rtol=1e-5, atol=1e-5), (out, ref)

    # Second check: tiny rotation exercises the Taylor fallback (small-angle) path.
    init_small = init.at[:3].set(jnp.array([3e-3, -2e-3, 1e-3], dtype=jnp.float32))
    out_s = jax.block_until_ready(pose_forward(R_weight, t_weight, init_small))
    ref_s = _se3_exp_ref(jnp.concatenate([R_weight[0], t_weight[0]]) + init_small)
    assert jnp.allclose(out_s, ref_s, rtol=1e-5, atol=1e-5), (out_s, ref_s)

    print("KERNEL_OK")
</pallas_src>

<mosaic_0001>
module attributes {stable_mosaic.version = 11 : i64} {
  func.func @_se3_exp_kernel(%arg0: memref<3xf32, #tpu.memory_space<smem>>, %arg1: memref<3xf32, #tpu.memory_space<smem>>, %arg2: memref<6xf32, #tpu.memory_space<smem>>, %arg3: memref<16xf32, #tpu.memory_space<smem>>) attributes {dimension_semantics = [], scalar_prefetch = 0 : i64, scratch_operands = 0 : i64, tpu.core_type = #tpu.core_type<tc>} {
    %c0 = arith.constant 0 : index
    %0 = memref.load %arg0[%c0] : memref<3xf32, #tpu.memory_space<smem>>
    %c0_0 = arith.constant 0 : index
    %1 = memref.load %arg2[%c0_0] : memref<6xf32, #tpu.memory_space<smem>>
    %2 = arith.addf %0, %1 : f32
    %c1 = arith.constant 1 : index
    %3 = memref.load %arg0[%c1] : memref<3xf32, #tpu.memory_space<smem>>
    %c1_1 = arith.constant 1 : index
    %4 = memref.load %arg2[%c1_1] : memref<6xf32, #tpu.memory_space<smem>>
    %5 = arith.addf %3, %4 : f32
    %c2 = arith.constant 2 : index
    %6 = memref.load %arg0[%c2] : memref<3xf32, #tpu.memory_space<smem>>
    %c2_2 = arith.constant 2 : index
    %7 = memref.load %arg2[%c2_2] : memref<6xf32, #tpu.memory_space<smem>>
    %8 = arith.addf %6, %7 : f32
    %c0_3 = arith.constant 0 : index
    %9 = memref.load %arg1[%c0_3] : memref<3xf32, #tpu.memory_space<smem>>
    %c3 = arith.constant 3 : index
    %10 = memref.load %arg2[%c3] : memref<6xf32, #tpu.memory_space<smem>>
    %11 = arith.addf %9, %10 : f32
    %c1_4 = arith.constant 1 : index
    %12 = memref.load %arg1[%c1_4] : memref<3xf32, #tpu.memory_space<smem>>
    %c4 = arith.constant 4 : index
    %13 = memref.load %arg2[%c4] : memref<6xf32, #tpu.memory_space<smem>>
    %14 = arith.addf %12, %13 : f32
    %c2_5 = arith.constant 2 : index
    %15 = memref.load %arg1[%c2_5] : memref<3xf32, #tpu.memory_space<smem>>
    %c5 = arith.constant 5 : index
    %16 = memref.load %arg2[%c5] : memref<6xf32, #tpu.memory_space<smem>>
    %17 = arith.addf %15, %16 : f32
    %18 = arith.mulf %2, %2 : f32
    %19 = arith.mulf %5, %5 : f32
    %20 = arith.addf %18, %19 : f32
    %21 = arith.mulf %8, %8 : f32
    %22 = arith.addf %20, %21 : f32
    %cst = arith.constant 9.99999974E-5 : f32
    %23 = arith.cmpf olt, %22, %cst : f32
    %cst_6 = arith.constant 1.000000e+00 : f32
    %24 = arith.select %23, %cst_6, %22 : f32
    %25 = math.sqrt %24 : f32
    %26 = math.rsqrt %24 : f32
    %27 = arith.mulf %26, %26 : f32
    %28 = math.sin %25 : f32
    %cst_7 = arith.constant 5.000000e-01 : f32
    %29 = arith.mulf %cst_7, %25 : f32
    %30 = math.sin %29 : f32
    %cst_8 = arith.constant 0.166666672 : f32
    %31 = arith.mulf %22, %cst_8 : f32
    %cst_9 = arith.constant 1.000000e+00 : f32
    %32 = arith.subf %cst_9, %31 : f32
    %33 = arith.mulf %28, %26 : f32
    %34 = arith.select %23, %32, %33 : f32
    %cst_10 = arith.constant 0.0416666679 : f32
    %35 = arith.mulf %22, %cst_10 : f32
    %cst_11 = arith.constant 5.000000e-01 : f32
    %36 = arith.subf %cst_11, %35 : f32
    %cst_12 = arith.constant 2.000000e+00 : f32
    %37 = arith.mulf %cst_12, %30 : f32
    %38 = arith.mulf %37, %30 : f32
    %39 = arith.mulf %38, %27 : f32
    %40 = arith.select %23, %36, %39 : f32
    %cst_13 = arith.constant 0.00833333377 : f32
    %41 = arith.mulf %22, %cst_13 : f32
    %cst_14 = arith.constant 0.166666672 : f32
    %42 = arith.subf %cst_14, %41 : f32
    %43 = arith.subf %25, %28 : f32
    %44 = arith.mulf %43, %27 : f32
    %45 = arith.mulf %44, %26 : f32
    %46 = arith.select %23, %42, %45 : f32
    %47 = arith.mulf %40, %2 : f32
    %48 = arith.mulf %47, %5 : f32
    %49 = arith.mulf %40, %2 : f32
    %50 = arith.mulf %49, %8 : f32
    %51 = arith.mulf %40, %5 : f32
    %52 = arith.mulf %51, %8 : f32
    %53 = arith.mulf %2, %11 : f32
    %54 = arith.mulf %5, %14 : f32
    %55 = arith.addf %53, %54 : f32
    %56 = arith.mulf %8, %17 : f32
    %57 = arith.addf %55, %56 : f32
    %58 = arith.mulf %5, %17 : f32
    %59 = arith.mulf %8, %14 : f32
    %60 = arith.subf %58, %59 : f32
    %61 = arith.mulf %8, %11 : f32
    %62 = arith.mulf %2, %17 : f32
    %63 = arith.subf %61, %62 : f32
    %64 = arith.mulf %2, %14 : f32
    %65 = arith.mulf %5, %11 : f32
    %66 = arith.subf %64, %65 : f32
    %67 = arith.mulf %5, %5 : f32
    %68 = arith.mulf %8, %8 : f32
    %69 = arith.addf %67, %68 : f32
    %70 = arith.mulf %40, %69 : f32
    %cst_15 = arith.constant 1.000000e+00 : f32
    %71 = arith.subf %cst_15, %70 : f32
    %c0_16 = arith.constant 0 : index
    %72 = memref.load %arg3[%c0_16] : memref<16xf32, #tpu.memory_space<smem>>
    memref.store %71, %arg3[%c0_16] : memref<16xf32, #tpu.memory_space<smem>>
    %cst_17 = arith.constant 0.000000e+00 : f32
    %73 = arith.subf %cst_17, %34 : f32
    %74 = arith.mulf %73, %8 : f32
    %75 = arith.addf %74, %48 : f32
    %c1_18 = arith.constant 1 : index
    %76 = memref.load %arg3[%c1_18] : memref<16xf32, #tpu.memory_space<smem>>
    memref.store %75, %arg3[%c1_18] : memref<16xf32, #tpu.memory_space<smem>>
    %77 = arith.mulf %34, %5 : f32
    %78 = arith.addf %77, %50 : f32
    %c2_19 = arith.constant 2 : index
    %79 = memref.load %arg3[%c2_19] : memref<16xf32, #tpu.memory_space<smem>>
    memref.store %78, %arg3[%c2_19] : memref<16xf32, #tpu.memory_space<smem>>
    %80 = arith.mulf %40, %60 : f32
    %81 = arith.addf %11, %80 : f32
    %82 = arith.mulf %2, %57 : f32
    %83 = arith.mulf %22, %11 : f32
    %84 = arith.subf %82, %83 : f32
    %85 = arith.mulf %46, %84 : f32
    %86 = arith.addf %81, %85 : f32
    %c3_20 = arith.constant 3 : index
    %87 = memref.load %arg3[%c3_20] : memref<16xf32, #tpu.memory_space<smem>>
    memref.store %86, %arg3[%c3_20] : memref<16xf32, #tpu.memory_space<smem>>
    %88 = arith.mulf %34, %8 : f32
    %89 = arith.addf %88, %48 : f32
    %c4_21 = arith.constant 4 : index
    %90 = memref.load %arg3[%c4_21] : memref<16xf32, #tpu.memory_space<smem>>
    memref.store %89, %arg3[%c4_21] : memref<16xf32, #tpu.memory_space<smem>>
    %91 = arith.mulf %2, %2 : f32
    %92 = arith.mulf %8, %8 : f32
    %93 = arith.addf %91, %92 : f32
    %94 = arith.mulf %40, %93 : f32
    %cst_22 = arith.constant 1.000000e+00 : f32
    %95 = arith.subf %cst_22, %94 : f32
    %c5_23 = arith.constant 5 : index
    %96 = memref.load %arg3[%c5_23] : memref<16xf32, #tpu.memory_space<smem>>
    memref.store %95, %arg3[%c5_23] : memref<16xf32, #tpu.memory_space<smem>>
    %cst_24 = arith.constant 0.000000e+00 : f32
    %97 = arith.subf %cst_24, %34 : f32
    %98 = arith.mulf %97, %2 : f32
    %99 = arith.addf %98, %52 : f32
    %c6 = arith.constant 6 : index
    %100 = memref.load %arg3[%c6] : memref<16xf32, #tpu.memory_space<smem>>
    memref.store %99, %arg3[%c6] : memref<16xf32, #tpu.memory_space<smem>>
    %101 = arith.mulf %40, %63 : f32
    %102 = arith.addf %14, %101 : f32
    %103 = arith.mulf %5, %57 : f32
    %104 = arith.mulf %22, %14 : f32
    %105 = arith.subf %103, %104 : f32
    %106 = arith.mulf %46, %105 : f32
    %107 = arith.addf %102, %106 : f32
    %c7 = arith.constant 7 : index
    %108 = memref.load %arg3[%c7] : memref<16xf32, #tpu.memory_space<smem>>
    memref.store %107, %arg3[%c7] : memref<16xf32, #tpu.memory_space<smem>>
    %cst_25 = arith.constant 0.000000e+00 : f32
    %109 = arith.subf %cst_25, %34 : f32
    %110 = arith.mulf %109, %5 : f32
    %111 = arith.addf %110, %50 : f32
    %c8 = arith.constant 8 : index
    %112 = memref.load %arg3[%c8] : memref<16xf32, #tpu.memory_space<smem>>
    memref.store %111, %arg3[%c8] : memref<16xf32, #tpu.memory_space<smem>>
    %113 = arith.mulf %34, %2 : f32
    %114 = arith.addf %113, %52 : f32
    %c9 = arith.constant 9 : index
    %115 = memref.load %arg3[%c9] : memref<16xf32, #tpu.memory_space<smem>>
    memref.store %114, %arg3[%c9] : memref<16xf32, #tpu.memory_space<smem>>
    %116 = arith.mulf %2, %2 : f32
    %117 = arith.mulf %5, %5 : f32
    %118 = arith.addf %116, %117 : f32
    %119 = arith.mulf %40, %118 : f32
    %cst_26 = arith.constant 1.000000e+00 : f32
    %120 = arith.subf %cst_26, %119 : f32
    %c10 = arith.constant 10 : index
    %121 = memref.load %arg3[%c10] : memref<16xf32, #tpu.memory_space<smem>>
    memref.store %120, %arg3[%c10] : memref<16xf32, #tpu.memory_space<smem>>
    %122 = arith.mulf %40, %66 : f32
    %123 = arith.addf %17, %122 : f32
    %124 = arith.mulf %8, %57 : f32
    %125 = arith.mulf %22, %17 : f32
    %126 = arith.subf %124, %125 : f32
    %127 = arith.mulf %46, %126 : f32
    %128 = arith.addf %123, %127 : f32
    %c11 = arith.constant 11 : index
    %129 = memref.load %arg3[%c11] : memref<16xf32, #tpu.memory_space<smem>>
    memref.store %128, %arg3[%c11] : memref<16xf32, #tpu.memory_space<smem>>
    %cst_27 = arith.constant 0.000000e+00 : f32
    %c12 = arith.constant 12 : index
    %130 = memref.load %arg3[%c12] : memref<16xf32, #tpu.memory_space<smem>>
    memref.store %cst_27, %arg3[%c12] : memref<16xf32, #tpu.memory_space<smem>>
    %cst_28 = arith.constant 0.000000e+00 : f32
    %c13 = arith.constant 13 : index
    %131 = memref.load %arg3[%c13] : memref<16xf32, #tpu.memory_space<smem>>
    memref.store %cst_28, %arg3[%c13] : memref<16xf32, #tpu.memory_space<smem>>
    %cst_29 = arith.constant 0.000000e+00 : f32
    %c14 = arith.constant 14 : index
    %132 = memref.load %arg3[%c14] : memref<16xf32, #tpu.memory_space<smem>>
    memref.store %cst_29, %arg3[%c14] : memref<16xf32, #tpu.memory_space<smem>>
    %cst_30 = arith.constant 1.000000e+00 : f32
    %c15 = arith.constant 15 : index
    %133 = memref.load %arg3[%c15] : memref<16xf32, #tpu.memory_space<smem>>
    memref.store %cst_30, %arg3[%c15] : memref<16xf32, #tpu.memory_space<smem>>
    return
  }
}

</mosaic_0001>

<llo_original>
// kernel: tpu_custom_call.1
$region0: #{tpu_custom_call.1}
  #allocation0 [shape = 'u32[]', space=smem, size = 0x4, offset = 0x4, fixed_abs, tag = 'smem constant byte address 0x4 - core index']
  #allocation1 [shape = 'u32[144,128]{1,0:T(1,128)}', space=vmem, size = 0x12000, scoped, tag = 'internal scratch']
  %s0 = inlined_call_operand.hbm [shape: f32[3], index: 0, kind: input, shape index: {}]
  %s1 = inlined_call_operand.vmem [shape: f32[3], index: 1, kind: input, shape index: {}]
  %s2 = inlined_call_operand.vmem [shape: f32[6], index: 2, kind: input, shape index: {}]
  %s3 = inlined_call_operand.hbm [shape: f32[16], index: 3, kind: output, shape index: {}]
  %s4 = sld [smem:[#allocation0]]
  $region34: #{tpu_custom_call.1} parent=0
    _
  %s6 = ssub.s32 1, %s4
  %s7 = scalar_select 0, %s6, %s4
  $region1: #{tpu_custom_call.1} parent=0
    #allocation2 [shape = 'u8[512]{0}', space=smem, size = 0x200, scoped, tag = 'input window, operand 0, single buffered']
    #allocation3 [shape = 's32[1]{0}', space=sflag, size = 0x4, scoped, tag = 'scoped memory for tpu_custom_call.1']
    #allocation4 [shape = 's32[1]{0}', space=sflag, size = 0x4, scoped, tag = 'scoped memory for tpu_custom_call.1']
    #allocation5 [shape = 's32[1]{0}', space=sflag, size = 0x4, scoped, tag = 'scoped memory for tpu_custom_call.1']
    #allocation6 [shape = 'u8[512]{0}', space=smem, size = 0x200, scoped, tag = 'input window, operand 1, single buffered']
    #allocation7 [shape = 'u8[512]{0}', space=smem, size = 0x200, scoped, tag = 'input window, operand 2, single buffered']
    #allocation8 [shape = 's32[1]{0}', space=sflag, size = 0x4, scoped, tag = 'scoped memory for tpu_custom_call.1']
    #allocation9 [shape = 'u8[512]{0}', space=smem, size = 0x200, scoped, tag = 'output window, operand 0, single buffered']
    %8 = vsyncpa [#allocation3], 0
    %9 = vsyncpa [#allocation5], 0
    %10 = vsyncpa [#allocation8], 0
    %11 = vsyncpa [#allocation4], 0
    // Predicated region
    $region2: #{tpu_custom_call.1} parent=1 // pred_check
      _
    $region3: #{tpu_custom_call.1} parent=1 // pred_check_branch
      %13 = sbr.rel (0) target = $region5
    $region4: #{tpu_custom_call.1} parent=1 // pred_region
      %s15 = ssub.s32 16, 16
      %16 = vsyncadd [#allocation3], %s15
      %19 = dma.hbm_to_smem %s0, 16, [#allocation2], [#allocation3]
    $region5: #{tpu_custom_call.1} parent=1 // pred_fallthru
      _
    // Predicated region
    $region6: #{tpu_custom_call.1} parent=1 // pred_check
      _
    $region7: #{tpu_custom_call.1} parent=1 // pred_check_branch
      %21 = sbr.rel (0) target = $region9
    $region8: #{tpu_custom_call.1} parent=1 // pred_region
      %s23 = ssub.s32 16, 16
      %24 = vsyncadd [#allocation5], %s23
      %s26 = sshll.u32 %s1, 4
      %s27 = int_to_ptr.vmem [resolvable:$true] %s26
      %29 = dma.vmem_to_smem %s27, 16, [#allocation6], [#allocation5]
    $region9: #{tpu_custom_call.1} parent=1 // pred_fallthru
      _
    // Predicated region
    $region10: #{tpu_custom_call.1} parent=1 // pred_check
      _
    $region11: #{tpu_custom_call.1} parent=1 // pred_check_branch
      %31 = sbr.rel (0) target = $region13
    $region12: #{tpu_custom_call.1} parent=1 // pred_region
      %s33 = ssub.s32 16, 16
      %34 = vsyncadd [#allocation8], %s33
      %s36 = sshll.u32 %s2, 4
      %s37 = int_to_ptr.vmem [resolvable:$true] %s36
      %39 = dma.vmem_to_smem %s37, 16, [#allocation7], [#allocation8]
    $region13: #{tpu_custom_call.1} parent=1 // pred_fallthru
      _
    // Predicated region
    $region14: #{tpu_custom_call.1} parent=1 // pred_check
      _
    $region15: #{tpu_custom_call.1} parent=1 // pred_check_branch
      %41 = sbr.rel (0) target = $region17
    $region16: #{tpu_custom_call.1} parent=1 // pred_region
      %42 = dma.done [#allocation3], 16
    $region17: #{tpu_custom_call.1} parent=1 // pred_fallthru
      _
    // Predicated region
    $region18: #{tpu_custom_call.1} parent=1 // pred_check
      _
    $region19: #{tpu_custom_call.1} parent=1 // pred_check_branch
      %44 = sbr.rel (0) target = $region21
    $region20: #{tpu_custom_call.1} parent=1 // pred_region
      %45 = dma.done [#allocation5], 16
    $region21: #{tpu_custom_call.1} parent=1 // pred_fallthru
      _
    // Predicated region
    $region22: #{tpu_custom_call.1} parent=1 // pred_check
      _
    $region23: #{tpu_custom_call.1} parent=1 // pred_check_branch
      %47 = sbr.rel (0) target = $region25
    $region24: #{tpu_custom_call.1} parent=1 // pred_region
      %48 = dma.done [#allocation8], 16
    $region25: #{tpu_custom_call.1} parent=1 // pred_fallthru
      _
    %49 = sfence
    %s50 = sld [smem:[#allocation2]]
    %s51 = sld [smem:[#allocation7]]
    %s52 = sadd.f32 %s50, %s51
    %s53 = sld [smem:[#allocation2 + $0x1]]
    %s54 = sld [smem:[#allocation7 + $0x1]]
    %s55 = sadd.f32 %s53, %s54
    %s56 = sld [smem:[#allocation2 + $0x2]]
    %s57 = sld [smem:[#allocation7 + $0x2]]
    %s58 = sadd.f32 %s56, %s57
    %s59 = sld [smem:[#allocation6]]
    %s60 = sld [smem:[#allocation7 + $0x3]]
    %s61 = sadd.f32 %s59, %s60
    %s62 = sld [smem:[#allocation6 + $0x1]]
    %s63 = sld [smem:[#allocation7 + $0x4]]
    %s64 = sadd.f32 %s62, %s63
    %s65 = sld [smem:[#allocation6 + $0x2]]
    %s66 = sld [smem:[#allocation7 + $0x5]]
    %s67 = sadd.f32 %s65, %s66
    %s68 = smul.f32 %s52, %s52
    %s69 = smul.f32 %s55, %s55
    %s70 = sadd.f32 %s68, %s69
    %s71 = smul.f32 %s58, %s58
    %s72 = sadd.f32 %s70, %s71
    %p73 = scmp.lt.f32.partialorder %s72, 0.0001
    %s74 = scalar_select %p73, 1.0, %s72
    %v75 = vstv %s74
    %v76 = vrsqrt.pop %v75
    %v77 = vmul.f32 %v75, %v76
    %vm78 = vcmp.eq.f32.partialorder %v75, inf
    %v79 = vsel %vm78, %v75, %v77
    %vm80 = vcmp.eq.f32.partialorder %v75, 0.0
    %v81 = vand.u32 %v75, 2147483648
    %v82 = vsel %vm80, %v81, %v79
    %s83 = vtos %v82
    %v84 = vstv %s74
    %v85 = vrsqrt.pop %v84
    %s86 = vtos %v85
    %s87 = smul.f32 %s86, %s86
    %v88 = vstv %s83
    %v89 = vand.u32 2147483647, %v88
    %vm90 = vcmp.le.f32.partialorder %v89, 0.7853982
    %vm91 = vcmp.lt.s32.totalorder %v88, 0
    %v92 = vand.u32 %v88, 2139095040
    %v93 = vshrl.u32 %v92, 23
    %v94 = vsub.s32 %v93, 127
    %v95 = vand.u32 2147483647, %v88
    %v96 = vand.u32 %v95, 8388607
    %v97 = vor.u32 %v96, 8388608
    %v98 = vsub.s32 0, %v97
    %v99 = vadd.s32 %v94, 1
    %vm100 = vcmp.gt.s32.totalorder %v99, 0
    %v101 = vsel %vm100, %v99, 0
    %v102 = vshrl.u32 %v101, 5
    %v103 = vand.u32 %v101, 31
    %v104 = vsub.s32 32, %v103
    %v105 = vshrl.u32 683565275, %v104
    %v106 = vshll.u32 683565275, %v103
    %v107 = vshrl.u32 2475754826, %v104
    %v108 = vor.u32 %v106, %v107
    %v109 = vshll.u32 2475754826, %v103
    %v110 = vshrl.u32 2131351028, %v104
    %v111 = vor.u32 %v109, %v110
    %v112 = vshll.u32 2131351028, %v103
    %v113 = vshrl.u32 2102212464, %v104
    %v114 = vor.u32 %v112, %v113
    %v115 = vshll.u32 2102212464, %v103
    %v116 = vshrl.u32 920167782, %v104
    %v117 = vor.u32 %v115, %v116
    %v118 = vshll.u32 920167782, %v103
    %v119 = vshrl.u32 1326507024, %v104
    %v120 = vor.u32 %v118, %v119
    %vm121 = vcmp.lt.s32.totalorder %v102, 1
    %vm122 = vcmp.lt.s32.totalorder %v102, 2
    %vm123 = vcmp.lt.s32.totalorder %v102, 3
    %vm124 = vcmp.lt.s32.totalorder %v102, 4
    %v125 = vsel %vm121, %v105, %v108
    %v126 = vsel %vm124, %v114, 2102212464
    %v127 = vsel %vm123, %v111, %v126
    %v128 = vsel %vm122, %v125, %v127
    %v129 = vsel %vm121, %v108, %v111
    %v130 = vsel %vm124, %v117, 920167782
    %v131 = vsel %vm123, %v114, %v130
    %v132 = vsel %vm122, %v129, %v131
    %v133 = vsel %vm121, %v111, %v114
    %v134 = vsel %vm124, %v120, 1326507024
    %v135 = vsel %vm123, %v117, %v134
    %v136 = vsel %vm122, %v133, %v135
    %v137 = vshll.u32 %v97, 8
    %v138 = vmul.u32.u64.compose %v137, %v136
    %v139 = vextract.low.u32 %v138
    %v140 = vextract.high.u32 %v138
    %v141 = vmul.u32.u64.compose %v137, %v132
    %v142 = vextract.low.u32 %v141
    %v143 = vextract.high.u32 %v141
    %v144 = vmul.u32 %v137, %v128
    %v145 = vadd.s32 %v140, %v142
    %vm146 = vc.u32 %v140, %v142
    %v147 = vadd.s32 %v143, 1
    %v148 = vsel %vm146, %v147, %v143
    %v149 = vadd.s32 %v144, %v148
    %v150 = vadd.s32 %v149, 536870912
    %v151 = vshrl.u32 %v150, 30
    %v152 = vshll.u32 %v151, 30
    %v153 = vsub.s32 %v149, %v152
    %vm154 = vcmp.lt.s32.totalorder %v153, 0
    %v155 = vsub.s32 0, %v153
    %v156 = vsel %vm154, %v155, %v153
    %v157 = vclz %v156
    %v158 = vsub.s32 %v157, 2
    %vm159 = vcmp.gt.s32.totalorder 0, %v158
    %v160 = vsel %vm159, 0, %v158
    %v161 = vsub.s32 32, %v160
    %v162 = vshll.u32 %v153, %v160
    %v163 = vshrl.u32 %v145, %v161
    %v164 = vor.u32 %v162, %v163
    %v165 = vsub.s32 4294967266, %v160
    %v166 = vadd.s32 %v165, 127
    %v167 = vshll.u32 %v166, 23
    %v168 = vor.u32 4788187, %v167
    %v169 = vand.u32 2147483647, %v168
    %v171 = vcvt.s32.f32 %v164
    %v172 = vmul.f32 %v171, %v169
    %v173 = vxor.u32 %v172, 2147483648
    %v174 = vsel %vm91, %v173, %v172
    %v175 = vsub.s32 4, %v151
    %v176 = vsel %vm91, %v175, %v151
    %v177 = vsel %vm90, %v88, %v174
    %v178 = vsel %vm90, 0, %v176
    %v179 = vcosq.f32.pop %v177
    %v180 = vsinq.f32.pop %v177
    %vm181 = vweird.f32 %v88
    %v182 = vadd.s32 %v178, 3
    %v183 = vand.u32 %v182, 3
    %vm184 = vcmp.lt.s32.totalorder %v183, 2
    %vm185 = vcmp.eq.s32.totalorder %v183, 0
    %v186 = vxor.u32 %v180, 2147483648
    %v187 = vsel %vm185, %v179, %v186
    %vm188 = vcmp.eq.s32.totalorder %v183, 2
    %v189 = vxor.u32 %v179, 2147483648
    %v190 = vsel %vm188, %v189, %v180
    %v191 = vsel %vm184, %v187, %v190
    %v192 = vsel %vm181, nan, %v191
    %s193 = vtos %v192
    %s194 = smul.f32 %s83, 0.5
    %v195 = vstv %s194
    %v196 = vand.u32 2147483647, %v195
    %vm197 = vcmp.le.f32.partialorder %v196, 0.7853982
    %vm198 = vcmp.lt.s32.totalorder %v195, 0
    %v199 = vand.u32 %v195, 2139095040
    %v200 = vshrl.u32 %v199, 23
    %v201 = vsub.s32 %v200, 127
    %v202 = vand.u32 2147483647, %v195
    %v203 = vand.u32 %v202, 8388607
    %v204 = vor.u32 %v203, 8388608
    %v205 = vsub.s32 0, %v204
    %v206 = vadd.s32 %v201, 1
    %vm207 = vcmp.gt.s32.totalorder %v206, 0
    %v208 = vsel %vm207, %v206, 0
    %v209 = vshrl.u32 %v208, 5
    %v210 = vand.u32 %v208, 31
    %v211 = vsub.s32 32, %v210
    %v212 = vshrl.u32 683565275, %v211
    %v213 = vshll.u32 683565275, %v210
    %v214 = vshrl.u32 2475754826, %v211
    %v215 = vor.u32 %v213, %v214
    %v216 = vshll.u32 2475754826, %v210
    %v217 = vshrl.u32 2131351028, %v211
    %v218 = vor.u32 %v216, %v217
    %v219 = vshll.u32 2131351028, %v210
    %v220 = vshrl.u32 2102212464, %v211
    %v221 = vor.u32 %v219, %v220
    %v222 = vshll.u32 2102212464, %v210
    %v223 = vshrl.u32 920167782, %v211
    %v224 = vor.u32 %v222, %v223
    %v225 = vshll.u32 920167782, %v210
    %v226 = vshrl.u32 1326507024, %v211
    %v227 = vor.u32 %v225, %v226
    %vm228 = vcmp.lt.s32.totalorder %v209, 1
    %vm229 = vcmp.lt.s32.totalorder %v209, 2
    %vm230 = vcmp.lt.s32.totalorder %v209, 3
    %vm231 = vcmp.lt.s32.totalorder %v209, 4
    %v232 = vsel %vm228, %v212, %v215
    %v233 = vsel %vm231, %v221, 2102212464
    %v234 = vsel %vm230, %v218, %v233
    %v235 = vsel %vm229, %v232, %v234
    %v236 = vsel %vm228, %v215, %v218
    %v237 = vsel %vm231, %v224, 920167782
    %v238 = vsel %vm230, %v221, %v237
    %v239 = vsel %vm229, %v236, %v238
    %v240 = vsel %vm228, %v218, %v221
    %v241 = vsel %vm231, %v227, 1326507024
    %v242 = vsel %vm230, %v224, %v241
    %v243 = vsel %vm229, %v240, %v242
    %v244 = vshll.u32 %v204, 8
    %v245 = vmul.u32.u64.compose %v244, %v243
    %v246 = vextract.low.u32 %v245
    %v247 = vextract.high.u32 %v245
    %v248 = vmul.u32.u64.compose %v244, %v239
    %v249 = vextract.low.u32 %v248
    %v250 = vextract.high.u32 %v248
    %v251 = vmul.u32 %v244, %v235
    %v252 = vadd.s32 %v247, %v249
    %vm253 = vc.u32 %v247, %v249
    %v254 = vadd.s32 %v250, 1
    %v255 = vsel %vm253, %v254, %v250
    %v256 = vadd.s32 %v251, %v255
    %v257 = vadd.s32 %v256, 536870912
    %v258 = vshrl.u32 %v257, 30
    %v259 = vshll.u32 %v258, 30
    %v260 = vsub.s32 %v256, %v259
    %vm261 = vcmp.lt.s32.totalorder %v260, 0
    %v262 = vsub.s32 0, %v260
    %v263 = vsel %vm261, %v262, %v260
    %v264 = vclz %v263
    %v265 = vsub.s32 %v264, 2
    %vm266 = vcmp.gt.s32.totalorder 0, %v265
    %v267 = vsel %vm266, 0, %v265
    %v268 = vsub.s32 32, %v267
    %v269 = vshll.u32 %v260, %v267
    %v270 = vshrl.u32 %v252, %v268
    %v271 = vor.u32 %v269, %v270
    %v272 = vsub.s32 4294967266, %v267
    %v273 = vadd.s32 %v272, 127
    %v274 = vshll.u32 %v273, 23
    %v275 = vor.u32 4788187, %v274
    %v276 = vand.u32 2147483647, %v275
    %v278 = vcvt.s32.f32 %v271
    %v279 = vmul.f32 %v278, %v276
    %v280 = vxor.u32 %v279, 2147483648
    %v281 = vsel %vm198, %v280, %v279
    %v282 = vsub.s32 4, %v258
    %v283 = vsel %vm198, %v282, %v258
    %v284 = vsel %vm197, %v195, %v281
    %v285 = vsel %vm197, 0, %v283
    %v286 = vcosq.f32.pop %v284
    %v287 = vsinq.f32.pop %v284
    %vm288 = vweird.f32 %v195
    %v289 = vadd.s32 %v285, 3
    %v290 = vand.u32 %v289, 3
    %vm291 = vcmp.lt.s32.totalorder %v290, 2
    %vm292 = vcmp.eq.s32.totalorder %v290, 0
    %v293 = vxor.u32 %v287, 2147483648
    %v294 = vsel %vm292, %v286, %v293
    %vm295 = vcmp.eq.s32.totalorder %v290, 2
    %v296 = vxor.u32 %v286, 2147483648
    %v297 = vsel %vm295, %v296, %v287
    %v298 = vsel %vm291, %v294, %v297
    %v299 = vsel %vm288, nan, %v298
    %s300 = vtos %v299
    %s301 = smul.f32 %s72, 0.16666667
    %s302 = ssub.f32 1.0, %s301
    %s303 = smul.f32 %s193, %s86
    %s304 = scalar_select %p73, %s302, %s303
    %s305 = smul.f32 %s72, 0.041666668
    %s306 = ssub.f32 0.5, %s305
    %s307 = smul.f32 %s300, 2.0
    %s308 = smul.f32 %s307, %s300
    %s309 = smul.f32 %s308, %s87
    %s310 = scalar_select %p73, %s306, %s309
    %s311 = smul.f32 %s72, 0.008333334
    %s312 = ssub.f32 0.16666667, %s311
    %s313 = ssub.f32 %s83, %s193
    %s314 = smul.f32 %s313, %s87
    %s315 = smul.f32 %s314, %s86
    %s316 = scalar_select %p73, %s312, %s315
    %s317 = smul.f32 %s310, %s52
    %s318 = smul.f32 %s317, %s55
    %s319 = smul.f32 %s317, %s58
    %s320 = smul.f32 %s310, %s55
    %s321 = smul.f32 %s320, %s58
    %s322 = smul.f32 %s52, %s61
    %s323 = smul.f32 %s55, %s64
    %s324 = sadd.f32 %s322, %s323
    %s325 = smul.f32 %s58, %s67
    %s326 = sadd.f32 %s324, %s325
    %s327 = smul.f32 %s55, %s67
    %s328 = smul.f32 %s58, %s64
    %s329 = ssub.f32 %s327, %s328
    %s330 = smul.f32 %s58, %s61
    %s331 = smul.f32 %s52, %s67
    %s332 = ssub.f32 %s330, %s331
    %s333 = smul.f32 %s52, %s64
    %s334 = smul.f32 %s55, %s61
    %s335 = ssub.f32 %s333, %s334
    %s336 = sadd.f32 %s69, %s71
    %s337 = smul.f32 %s310, %s336
    %s338 = ssub.f32 1.0, %s337
    %s339 = scalar_lea.smem [#allocation9], 0
    %340 = sst [smem:[%s339]] %s338
    %s341 = ssub.f32 0.0, %s304
    %s342 = smul.f32 %s341, %s58
    %s343 = sadd.f32 %s342, %s318
    %s344 = scalar_lea.smem [#allocation9], 1
    %345 = sst [smem:[%s344]] %s343
    %s346 = smul.f32 %s304, %s55
    %s347 = sadd.f32 %s346, %s319
    %s348 = scalar_lea.smem [#allocation9], 2
    %349 = sst [smem:[%s348]] %s347
    %s350 = smul.f32 %s310, %s329
    %s351 = sadd.f32 %s61, %s350
    %s352 = smul.f32 %s52, %s326
    %s353 = smul.f32 %s72, %s61
    %s354 = ssub.f32 %s352, %s353
    %s355 = smul.f32 %s316, %s354
    %s356 = sadd.f32 %s351, %s355
    %s357 = scalar_lea.smem [#allocation9], 3
    %358 = sst [smem:[%s357]] %s356
    %s359 = smul.f32 %s304, %s58
    %s360 = sadd.f32 %s359, %s318
    %s361 = scalar_lea.smem [#allocation9], 4
    %362 = sst [smem:[%s361]] %s360
    %s363 = sadd.f32 %s68, %s71
    %s364 = smul.f32 %s310, %s363
    %s365 = ssub.f32 1.0, %s364
    %s366 = scalar_lea.smem [#allocation9], 5
    %367 = sst [smem:[%s366]] %s365
    %s368 = smul.f32 %s341, %s52
    %s369 = sadd.f32 %s368, %s321
    %s370 = scalar_lea.smem [#allocation9], 6
    %371 = sst [smem:[%s370]] %s369
    %s372 = smul.f32 %s310, %s332
    %s373 = sadd.f32 %s64, %s372
    %s374 = smul.f32 %s55, %s326
    %s375 = smul.f32 %s72, %s64
    %s376 = ssub.f32 %s374, %s375
    %s377 = smul.f32 %s316, %s376
    %s378 = sadd.f32 %s373, %s377
    %s379 = scalar_lea.smem [#allocation9], 7
    %380 = sst [smem:[%s379]] %s378
    %s381 = smul.f32 %s341, %s55
    %s382 = sadd.f32 %s381, %s319
    %s383 = scalar_lea.smem [#allocation9], 8
    %384 = sst [smem:[%s383]] %s382
    %s385 = smul.f32 %s304, %s52
    %s386 = sadd.f32 %s385, %s321
    %s387 = scalar_lea.smem [#allocation9], 9
    %388 = sst [smem:[%s387]] %s386
    %s389 = smul.f32 %s310, %s70
    %s390 = ssub.f32 1.0, %s389
    %s391 = scalar_lea.smem [#allocation9], 10
    %392 = sst [smem:[%s391]] %s390
    %s393 = smul.f32 %s310, %s335
    %s394 = sadd.f32 %s67, %s393
    %s395 = smul.f32 %s58, %s326
    %s396 = smul.f32 %s72, %s67
    %s397 = ssub.f32 %s395, %s396
    %s398 = smul.f32 %s316, %s397
    %s399 = sadd.f32 %s394, %s398
    %s400 = scalar_lea.smem [#allocation9], 11
    %401 = sst [smem:[%s400]] %s399
    %s402 = scalar_lea.smem [#allocation9], 12
    %403 = sst [smem:[%s402]] 0.0
    %s404 = scalar_lea.smem [#allocation9], 13
    %405 = sst [smem:[%s404]] 0.0
    %s406 = scalar_lea.smem [#allocation9], 14
    %407 = sst [smem:[%s406]] 0.0
    %s408 = scalar_lea.smem [#allocation9], 15
    %409 = sst [smem:[%s408]] 1.0
    // Predicated region
    $region26: #{tpu_custom_call.1} parent=1 // pred_check
      _
    $region27: #{tpu_custom_call.1} parent=1 // pred_check_branch
      %411 = sbr.rel (0) target = $region29
    $region28: #{tpu_custom_call.1} parent=1 // pred_region
      %s413 = ssub.s32 16, 16
      %414 = vsyncadd [#allocation4], %s413
      %417 = dma.smem_to_hbm [#allocation9], 16, %s3, [#allocation4]
    $region29: #{tpu_custom_call.1} parent=1 // pred_fallthru
      _
    // Predicated region
    $region30: #{tpu_custom_call.1} parent=1 // pred_check
      _
    $region31: #{tpu_custom_call.1} parent=1 // pred_check_branch
      %419 = sbr.rel (0) target = $region33
    $region32: #{tpu_custom_call.1} parent=1 // pred_region
      %420 = dma.done [#allocation4], 16
    $region33: #{tpu_custom_call.1} parent=1 // pred_fallthru
      _
    %421 = sfence
    %422 = vsyncpa [#allocation3], 1
    %423 = vsyncpa [#allocation4], 1
    %424 = vsyncpa [#allocation5], 1
    %425 = vsyncpa [#allocation8], 1

</llo_original>
